<compile_context>
chip_gen: v5e
topology: v5e:2x2
jax: 0.10.0
libtpu: 0.0.40
codegen_flags: <defaults>
</compile_context>

<pallas_src>
import functools

import jax
import jax.numpy as jnp
from jax.experimental import pallas as pl
from jax.experimental.pallas import tpu as pltpu


def _round_up(n, m):
    return ((n + m - 1) // m) * m


def _device_kind():
    try:
        return jax.devices()[0].device_kind.lower()
    except Exception:
        return ""


def _bf16_eup_ok(kind=None):
    """v6e / v7x have bf16-native VPU/EUP; v5e and older do not."""
    kind = _device_kind() if kind is None else kind
    return any(t in kind for t in ("v6", "6e", "v7", "7x"))


def _target_tiles(kind=None):
    """v7x has 2 TensorCores per chip -> want >=2 grid steps; v5e/v6e -> 1."""
    kind = _device_kind() if kind is None else kind
    return 2 if any(t in kind for t in ("v7", "7x")) else 1


def _make_kernel(NH, bf16_tanh):
    def kernel(x_ref, p_ref, w2_ref, o_ref):
        # Feature-major: batch on lanes.
        #   x_ref : (1, TB)    p_ref : (NN, 5) packed [w1 | b1 | b2 | w3 | b3]
        #   w2_ref: (NH, NN)   o_ref : (1, TB)
        x = x_ref[...]                                   # (1, TB)
        p = p_ref[...]                                   # (NN, 5)
        w1 = p[:, 0:1]                                   # (NN, 1)
        b1 = p[:, 1:2]                                   # (NN, 1)
        b2 = p[0:NH, 2:3]                                # (NH, 1)
        w3 = p[0:NH, 3:4]                                # (NH, 1)
        b3 = p[0:1, 4:5]                                 # (1, 1)

        # Layer 1: in_features == 1 -> degenerate K=1 contraction; VPU
        # broadcast multiply instead of an MXU matmul.
        pre1 = w1 * x + b1                               # (NN, TB)

        if bf16_tanh:
            # bf16 EUP/VPU path (v6e / v7x only): ~halves tanh push count and
            # vreg traffic; MXU gets native bf16 inputs, f32 accumulation.
            h1 = jnp.tanh(pre1.astype(jnp.bfloat16))     # (NN, TB) bf16
            pre2 = jnp.dot(w2_ref[...].astype(jnp.bfloat16), h1,
                           preferred_element_type=jnp.float32) + b2
            h2 = jnp.tanh(pre2.astype(jnp.bfloat16)).astype(jnp.float32)
        else:
            h1 = jnp.tanh(pre1)                          # (NN, TB)
            pre2 = jnp.dot(w2_ref[...], h1,
                           preferred_element_type=jnp.float32) + b2
            h2 = jnp.tanh(pre2)                          # (NH, TB)

        # Layer 3: out_features == 1 -> VPU multiply + sublane (XLU) reduction;
        # keeps the output store lane-dense.
        out = jnp.sum(h2 * w3, axis=0, keepdims=True) + b3   # (1, TB)
        o_ref[...] = out.astype(o_ref.dtype)

    return kernel


def net_forward(x, w1, b1, w2, b2, w3, b3, *, block_b=2048, bf16_tanh=False):
    """Forward pass of Net.

    x : (B, 1) float32 (batch-major, as in PyTorch).
    Weights in PyTorch (out, in) layout, 1-D biases:
      w1: (NN, 1),  b1: (NN,)   -- nn.Linear(1, NN)
      w2: (NH, NN), b2: (NH,)   -- nn.Linear(NN, NH)
      w3: (1, NH),  b3: (1,)    -- nn.Linear(NH, 1)
    Returns (B, 1) float32.
    """
    B = x.shape[0]
    NN = w1.shape[0]
    NH = w2.shape[0]

    # (B,1) -> (1,B) is a free reshape (same flat order); no transpose copy.
    xt = x.reshape(1, B)

    # Pack the tiny per-feature params into a single (NN, 5) block so they ride
    # one VMEM-resident DMA stream instead of five sub-tile streams.
    pad = NN - NH
    packed = jnp.concatenate(
        [
            w1.reshape(NN, 1),
            b1.reshape(NN, 1),
            jnp.pad(b2.reshape(NH, 1), ((0, pad), (0, 0))),
            jnp.pad(w3.reshape(NH, 1), ((0, pad), (0, 0))),   # w3 is (1,NH)
            jnp.pad(b3.reshape(1, 1), ((0, NN - 1), (0, 0))),
        ],
        axis=1,
    )

    # 128-lane-aligned batch tile (robust against non-multiple block_b).
    tb = max(128, _round_up(min(block_b, B), 128))
    nt = _target_tiles()
    if nt > 1 and B > 128:
        # Keep >=2 grid steps on 2-TC chips (v7x) so both cores get work.
        tb = max(128, min(tb, _round_up(pl.cdiv(B, nt), 128)))
    grid = (pl.cdiv(B, tb),)

    const = lambda i: (0, 0)   # params: same (VMEM-resident) block every step
    out = pl.pallas_call(
        _make_kernel(NH, bf16_tanh),
        out_shape=jax.ShapeDtypeStruct((1, B), jnp.float32),
        grid=grid,
        in_specs=[
            pl.BlockSpec((1, tb), lambda i: (0, i)),   # x   (batch-tiled)
            pl.BlockSpec((NN, 5), const),              # packed small params
            pl.BlockSpec((NH, NN), const),             # w2
        ],
        out_specs=pl.BlockSpec((1, tb), lambda i: (0, i)),
        compiler_params=pltpu.CompilerParams(
            # "parallel" lets Mosaic shard the batch grid across TensorCores on
            # multi-TC parts (v7x); on single-TC v5e/v6e it is a no-op.
            dimension_semantics=("parallel",),
        ),
    )(xt, packed, w2)

    return out.reshape(B, 1)   # free reshape back to batch-major


def init_params(key, NN):
    """Torch-style init, PyTorch (out, in) weight layout and 1-D biases."""
    NH = NN // 2
    ks = jax.random.split(key, 6)

    def u(k, shape, fan_in):
        bound = 1.0 / float(fan_in) ** 0.5
        return jax.random.uniform(k, shape, jnp.float32, -bound, bound)

    w1 = u(ks[0], (NN, 1), 1)
    b1 = u(ks[1], (NN,), 1)
    w2 = u(ks[2], (NH, NN), NN)
    b2 = u(ks[3], (NH,), NN)
    w3 = u(ks[4], (1, NH), NH)
    b3 = u(ks[5], (1,), NH)
    return w1, b1, w2, b2, w3, b3


if __name__ == "__main__":
    NN = 32       # hidden width; second hidden = NN // 2 = 16
    B = 1000      # collocation points; exercises a ragged (write-masked) tile

    key = jax.random.PRNGKey(0)
    kx, kp = jax.random.split(key)
    x = jax.random.uniform(kx, (B, 1), jnp.float32, -1.0, 1.0)
    params = init_params(kp, NN)
    w1, b1, w2, b2, w3, b3 = params

    # pure-JAX reference using the PyTorch math/layout
    ref = jnp.tanh(x @ w1.T + b1)
    ref = jnp.tanh(ref @ w2.T + b2)
    ref = ref @ w3.T + b3

    # f32 path: exact module semantics.
    fwd = jax.jit(net_forward)
    out = jax.block_until_ready(fwd(x, *params))
    assert out.shape == (B, 1)
    err = float(jnp.max(jnp.abs(out - ref)))
    assert jnp.allclose(out, ref, atol=1e-5, rtol=1e-5), err

    # bf16-tanh fast path only on chips with a bf16 EUP/VPU (v6e / v7x);
    # activation precision drops to bf16, so only a loose sanity check here.
    if _bf16_eup_ok():
        fwd16 = jax.jit(functools.partial(net_forward, bf16_tanh=True))
        out16 = jax.block_until_ready(fwd16(x, *params))
        assert out16.shape == (B, 1)
        err16 = float(jnp.max(jnp.abs(out16 - ref)))
        assert err16 < 0.25, err16

    print("KERNEL_OK")
</pallas_src>

<mosaic_0001>
module attributes {stable_mosaic.version = 11 : i64} {
  func.func @kernel(%arg0: i32, %arg1: memref<1x1024xf32, #tpu.memory_space<vmem>>, %arg2: memref<32x5xf32, #tpu.memory_space<vmem>>, %arg3: memref<16x32xf32, #tpu.memory_space<vmem>>, %arg4: memref<1x1024xf32, #tpu.memory_space<vmem>>) attributes {dimension_semantics = [#tpu.dimension_semantics<parallel>], iteration_bounds = array<i64: 1>, scalar_prefetch = 0 : i64, scratch_operands = 0 : i64, tpu.core_type = #tpu.core_type<tc>, window_params = [{transform_indices = @transform_0, window_bounds = array<i64: 1, 1024>}, {pipeline_mode = #tpu.pipeline_mode<synchronous>, transform_indices = @transform_1, window_bounds = array<i64: 32, 5>}, {pipeline_mode = #tpu.pipeline_mode<synchronous>, transform_indices = @transform_2, window_bounds = array<i64: 16, 32>}, {transform_indices = @transform_3, window_bounds = array<i64: 1, 1024>}]} {
    %c0 = arith.constant 0 : index
    %c0_0 = arith.constant 0 : index
    %0 = vector.load %arg1[%c0, %c0_0] : memref<1x1024xf32, #tpu.memory_space<vmem>>, vector<1x1024xf32>
    %c0_1 = arith.constant 0 : index
    %c0_2 = arith.constant 0 : index
    %1 = vector.load %arg2[%c0_1, %c0_2] : memref<32x5xf32, #tpu.memory_space<vmem>>, vector<32x5xf32>
    %2 = vector.extract_strided_slice %1 {offsets = [0, 0], sizes = [32, 1], strides = [1, 1]} : vector<32x5xf32> to vector<32x1xf32>
    %3 = vector.extract_strided_slice %1 {offsets = [0, 1], sizes = [32, 1], strides = [1, 1]} : vector<32x5xf32> to vector<32x1xf32>
    %4 = vector.extract_strided_slice %1 {offsets = [0, 2], sizes = [16, 1], strides = [1, 1]} : vector<32x5xf32> to vector<16x1xf32>
    %5 = vector.extract_strided_slice %1 {offsets = [0, 3], sizes = [16, 1], strides = [1, 1]} : vector<32x5xf32> to vector<16x1xf32>
    %6 = vector.extract_strided_slice %1 {offsets = [0, 4], sizes = [1, 1], strides = [1, 1]} : vector<32x5xf32> to vector<1x1xf32>
    %7 = vector.broadcast %2 : vector<32x1xf32> to vector<32x1024xf32>
    %8 = vector.broadcast %0 : vector<1x1024xf32> to vector<32x1024xf32>
    %9 = arith.mulf %7, %8 : vector<32x1024xf32>
    %10 = vector.broadcast %3 : vector<32x1xf32> to vector<32x1024xf32>
    %11 = arith.addf %9, %10 : vector<32x1024xf32>
    %12 = math.tanh %11 : vector<32x1024xf32>
    %c0_3 = arith.constant 0 : index
    %c0_4 = arith.constant 0 : index
    %13 = vector.load %arg3[%c0_3, %c0_4] : memref<16x32xf32, #tpu.memory_space<vmem>>, vector<16x32xf32>
    %cst = arith.constant dense<0.000000e+00> : vector<16x1024xf32>
    %14 = tpu.matmul %13, %12, %cst {dimension_numbers = #tpu.dot_dimension_numbers<[1], [0], [0], [1], [0, 0, 1, 1], [], []>} : vector<16x32xf32>, vector<32x1024xf32>, vector<16x1024xf32> -> vector<16x1024xf32>
    %15 = vector.broadcast %4 : vector<16x1xf32> to vector<16x1024xf32>
    %16 = arith.addf %14, %15 : vector<16x1024xf32>
    %17 = math.tanh %16 : vector<16x1024xf32>
    %18 = vector.broadcast %5 : vector<16x1xf32> to vector<16x1024xf32>
    %19 = arith.mulf %17, %18 : vector<16x1024xf32>
    %cst_5 = arith.constant dense<0.000000e+00> : vector<1024xf32>
    %20 = vector.multi_reduction <add>, %19, %cst_5 [0] : vector<16x1024xf32> to vector<1024xf32>
    %21 = vector.shape_cast %20 : vector<1024xf32> to vector<1x1024xf32>
    %22 = vector.broadcast %6 : vector<1x1xf32> to vector<1x1024xf32>
    %23 = arith.addf %21, %22 : vector<1x1024xf32>
    %c0_6 = arith.constant 0 : index
    %c0_7 = arith.constant 0 : index
    %24 = vector.load %arg4[%c0_6, %c0_7] : memref<1x1024xf32, #tpu.memory_space<vmem>>, vector<1x1024xf32>
    tpu.vector_store %arg4[%c0_6, %c0_7], %23 {strides = array<i32>} : memref<1x1024xf32, #tpu.memory_space<vmem>>, vector<1x1024xf32>,
    return
  }
  func.func @transform_0(%arg0: i32) -> (i32, i32) {
    %c0_i32 = arith.constant 0 : i32
    %c0_i32_0 = arith.constant 0 : i32
    return %c0_i32, %arg0 : i32, i32
  }
  func.func @transform_1(%arg0: i32) -> (i32, i32) {
    %c0_i32 = arith.constant 0 : i32
    %c0_i32_0 = arith.constant 0 : i32
    %c0_i32_1 = arith.constant 0 : i32
    return %c0_i32, %c0_i32_0 : i32, i32
  }
  func.func @transform_2(%arg0: i32) -> (i32, i32) {
    %c0_i32 = arith.constant 0 : i32
    %c0_i32_0 = arith.constant 0 : i32
    %c0_i32_1 = arith.constant 0 : i32
    return %c0_i32, %c0_i32_0 : i32, i32
  }
  func.func @transform_3(%arg0: i32) -> (i32, i32) {
    %c0_i32 = arith.constant 0 : i32
    %c0_i32_0 = arith.constant 0 : i32
    return %c0_i32, %arg0 : i32, i32
  }
}

</mosaic_0001>

<llo_original>
// kernel: net_forward.1
$region0: #{net_forward.1}
  #allocation0 [shape = 'u32[]', space=smem, size = 0x4, offset = 0x4, fixed_abs, tag = 'smem constant byte address 0x4 - core index']
  #allocation1 [shape = 'u32[72,128]{1,0:T(1,128)}', space=vmem, size = 0x9000, scoped, tag = 'internal scratch']
  %s0 = inlined_call_operand.vmem [shape: f32[1,1000], index: 0, kind: input, shape index: {}]
  %s1 = inlined_call_operand.vmem [shape: f32[32,5], index: 1, kind: input, shape index: {}]
  %s2 = inlined_call_operand.vmem [shape: f32[16,32], index: 2, kind: input, shape index: {}]
  %s3 = inlined_call_operand.hbm [shape: f32[1,1000], index: 3, kind: output, shape index: {}]
  %s4 = sld [smem:[#allocation0]]
  $region22: #{net_forward.1} parent=0
    _
  %s6 = ssub.s32 1, %s4
  %s7 = scalar_select 0, %s6, %s4
  $region1: #{net_forward.1} parent=0
    #allocation2 [shape = 'u8[4096]{0}', space=vmem, size = 0x1000, scoped, tag = 'output window, operand 0, single buffered']
    #allocation3 [shape = 's32[1]{0}', space=sflag, size = 0x4, scoped, tag = 'scoped memory for net_forward.1']
    %8 = vsyncpa [#allocation3], 0
    // Predicated region
    $region2: #{net_forward.1} parent=1 // pred_check
      _
    $region3: #{net_forward.1} parent=1 // pred_check_branch
      %10 = sbr.rel (0) target = $region5
    $region4: #{net_forward.1} parent=1 // pred_region
      _
    $region5: #{net_forward.1} parent=1 // pred_fallthru
      _
    // Predicated region
    $region6: #{net_forward.1} parent=1 // pred_check
      _
    $region7: #{net_forward.1} parent=1 // pred_check_branch
      %12 = sbr.rel (0) target = $region9
    $region8: #{net_forward.1} parent=1 // pred_region
      _
    $region9: #{net_forward.1} parent=1 // pred_fallthru
      _
    // Predicated region
    $region10: #{net_forward.1} parent=1 // pred_check
      _
    $region11: #{net_forward.1} parent=1 // pred_check_branch
      %14 = sbr.rel (0) target = $region13
    $region12: #{net_forward.1} parent=1 // pred_region
      _
    $region13: #{net_forward.1} parent=1 // pred_fallthru
      _
    %v15 = vld [vmem:[%s0] sm:$0xff]
    %v16 = vld [vmem:[%s1] sm:$0xff]
    %v17 = vld [vmem:[%s1 + $0x8] sm:$0xff]
    %v18 = vld [vmem:[%s1 + $0x10] sm:$0xff]
    %v19 = vld [vmem:[%s1 + $0x18] sm:$0xff]
    %21 = vset.pattern.permute.xlu0 0
    %22 = vperm.xlu0 %21, %v16
    %v23 = vpop.permute.xlu0 %22
    %26 = vset.pattern.permute.xlu0 0
    %27 = vperm.xlu0 %26, %v17
    %v28 = vpop.permute.xlu0 %27
    %31 = vset.pattern.permute.xlu0 0
    %32 = vperm.xlu0 %31, %v18
    %v33 = vpop.permute.xlu0 %32
    %36 = vset.pattern.permute.xlu0 0
    %37 = vperm.xlu0 %36, %v19
    %v38 = vpop.permute.xlu0 %37
    %v41 = vperm.slane %v15, 0
    %v42 = vperm.slane %v15, 1
    %v43 = vperm.slane %v15, 2
    %v44 = vperm.slane %v15, 3
    %v45 = vperm.slane %v15, 4
    %v46 = vperm.slane %v15, 5
    %v47 = vperm.slane %v15, 6
    %v48 = vperm.slane %v15, 7
    %v57 = vmul.f32 %v23, %v41
    %v58 = vmul.f32 %v23, %v42
    %v59 = vmul.f32 %v23, %v43
    %v60 = vmul.f32 %v23, %v44
    %v61 = vmul.f32 %v23, %v45
    %v62 = vmul.f32 %v23, %v46
    %v63 = vmul.f32 %v23, %v47
    %v64 = vmul.f32 %v23, %v48
    %v65 = vmul.f32 %v28, %v41
    %v66 = vmul.f32 %v28, %v42
    %v67 = vmul.f32 %v28, %v43
    %v68 = vmul.f32 %v28, %v44
    %v69 = vmul.f32 %v28, %v45
    %v70 = vmul.f32 %v28, %v46
    %v71 = vmul.f32 %v28, %v47
    %v72 = vmul.f32 %v28, %v48
    %v73 = vmul.f32 %v33, %v41
    %v74 = vmul.f32 %v33, %v42
    %v75 = vmul.f32 %v33, %v43
    %v76 = vmul.f32 %v33, %v44
    %v77 = vmul.f32 %v33, %v45
    %v78 = vmul.f32 %v33, %v46
    %v79 = vmul.f32 %v33, %v47
    %v80 = vmul.f32 %v33, %v48
    %v81 = vmul.f32 %v38, %v41
    %v82 = vmul.f32 %v38, %v42
    %v83 = vmul.f32 %v38, %v43
    %v84 = vmul.f32 %v38, %v44
    %v85 = vmul.f32 %v38, %v45
    %v86 = vmul.f32 %v38, %v46
    %v87 = vmul.f32 %v38, %v47
    %v88 = vmul.f32 %v38, %v48
    %89 = vset.pattern.permute.xlu0 1
    %90 = vperm.xlu0 %89, %v16
    %v91 = vpop.permute.xlu0 %90
    %93 = vset.pattern.permute.xlu0 1
    %94 = vperm.xlu0 %93, %v17
    %v95 = vpop.permute.xlu0 %94
    %97 = vset.pattern.permute.xlu0 1
    %98 = vperm.xlu0 %97, %v18
    %v99 = vpop.permute.xlu0 %98
    %101 = vset.pattern.permute.xlu0 1
    %102 = vperm.xlu0 %101, %v19
    %v103 = vpop.permute.xlu0 %102
    %v105 = vadd.f32 %v57, %v91
    %v106 = vadd.f32 %v58, %v91
    %v107 = vadd.f32 %v59, %v91
    %v108 = vadd.f32 %v60, %v91
    %v109 = vadd.f32 %v61, %v91
    %v110 = vadd.f32 %v62, %v91
    %v111 = vadd.f32 %v63, %v91
    %v112 = vadd.f32 %v64, %v91
    %v113 = vadd.f32 %v65, %v95
    %v114 = vadd.f32 %v66, %v95
    %v115 = vadd.f32 %v67, %v95
    %v116 = vadd.f32 %v68, %v95
    %v117 = vadd.f32 %v69, %v95
    %v118 = vadd.f32 %v70, %v95
    %v119 = vadd.f32 %v71, %v95
    %v120 = vadd.f32 %v72, %v95
    %v121 = vadd.f32 %v73, %v99
    %v122 = vadd.f32 %v74, %v99
    %v123 = vadd.f32 %v75, %v99
    %v124 = vadd.f32 %v76, %v99
    %v125 = vadd.f32 %v77, %v99
    %v126 = vadd.f32 %v78, %v99
    %v127 = vadd.f32 %v79, %v99
    %v128 = vadd.f32 %v80, %v99
    %v129 = vadd.f32 %v81, %v103
    %v130 = vadd.f32 %v82, %v103
    %v131 = vadd.f32 %v83, %v103
    %v132 = vadd.f32 %v84, %v103
    %v133 = vadd.f32 %v85, %v103
    %v134 = vadd.f32 %v86, %v103
    %v135 = vadd.f32 %v87, %v103
    %v136 = vadd.f32 %v88, %v103
    %v137 = vtanh.pop %v105
    %v138 = vtanh.pop %v106
    %v139 = vtanh.pop %v107
    %v140 = vtanh.pop %v108
    %v141 = vtanh.pop %v109
    %v142 = vtanh.pop %v110
    %v143 = vtanh.pop %v111
    %v144 = vtanh.pop %v112
    %v145 = vtanh.pop %v113
    %v146 = vtanh.pop %v114
    %v147 = vtanh.pop %v115
    %v148 = vtanh.pop %v116
    %v149 = vtanh.pop %v117
    %v150 = vtanh.pop %v118
    %v151 = vtanh.pop %v119
    %v152 = vtanh.pop %v120
    %v153 = vtanh.pop %v121
    %v154 = vtanh.pop %v122
    %v155 = vtanh.pop %v123
    %v156 = vtanh.pop %v124
    %v157 = vtanh.pop %v125
    %v158 = vtanh.pop %v126
    %v159 = vtanh.pop %v127
    %v160 = vtanh.pop %v128
    %v161 = vtanh.pop %v129
    %v162 = vtanh.pop %v130
    %v163 = vtanh.pop %v131
    %v164 = vtanh.pop %v132
    %v165 = vtanh.pop %v133
    %v166 = vtanh.pop %v134
    %v167 = vtanh.pop %v135
    %v168 = vtanh.pop %v136
    %v169 = vld [vmem:[%s2] sm:$0xff]
    %v170 = vld [vmem:[%s2 + $0x8] sm:$0xff]
    %171 = vset.pattern.permute.xlu0 2
    %172 = vperm.xlu0 %171, %v16
    %v173 = vpop.permute.xlu0 %172
    %175 = vset.pattern.permute.xlu0 2
    %176 = vperm.xlu0 %175, %v17
    %v177 = vpop.permute.xlu0 %176
    %vm179 = vcmask 261120
    %v181 = vsel %vm179, %v169, 0
    %v184 = vsel %vm179, %v170, 0
    %186 = vmatpush.msra.mxu0 0.0
    %187 = vmatpush.msra.mxu0 0.0
    %188 = vmatpush.msra.mxu0 0.0
    %189 = vmatpush.msra.mxu0 0.0
    %190 = vmatpush.msra.mxu0 0.0
    %191 = vmatpush.msra.mxu0 0.0
    %192 = vmatpush.msra.mxu0 0.0
    %193 = vmatpush.msra.mxu0 0.0
    %194 = vmatpush.msra.mxu0 0.0
    %195 = vmatpush.msra.mxu0 0.0
    %196 = vmatpush.msra.mxu0 0.0
    %197 = vmatpush.msra.mxu0 0.0
    %198 = vmatpush.msra.mxu0 %v161
    %199 = vmatpush.msra.mxu0 %v153
    %200 = vmatpush.msra.mxu0 %v145
    %201 = vmatpush.msra.mxu0 %v137
    %202 = vmatmul.f32.gmra.mxu0 %v181
    %v203 = vpop.f32.mrf.mxu0
    %v204 = vadd.f32 %v173, %v203
    %205 = vmatmul.f32.gmra.mxu0 %v184
    %v206 = vpop.f32.mrf.mxu0
    %v207 = vadd.f32 %v177, %v206
    %208 = vdwg.mxu0
    %209 = vmatpush.msra.mxu0 0.0
    %210 = vmatpush.msra.mxu0 0.0
    %211 = vmatpush.msra.mxu0 0.0
    %212 = vmatpush.msra.mxu0 0.0
    %213 = vmatpush.msra.mxu0 0.0
    %214 = vmatpush.msra.mxu0 0.0
    %215 = vmatpush.msra.mxu0 0.0
    %216 = vmatpush.msra.mxu0 0.0
    %217 = vmatpush.msra.mxu0 0.0
    %218 = vmatpush.msra.mxu0 0.0
    %219 = vmatpush.msra.mxu0 0.0
    %220 = vmatpush.msra.mxu0 0.0
    %221 = vmatpush.msra.mxu0 %v162
    %222 = vmatpush.msra.mxu0 %v154
    %223 = vmatpush.msra.mxu0 %v146
    %224 = vmatpush.msra.mxu0 %v138
    %225 = vmatmul.f32.gmra.mxu0 %v181
    %v226 = vpop.f32.mrf.mxu0
    %v227 = vadd.f32 %v173, %v226
    %228 = vmatmul.f32.gmra.mxu0 %v184
    %v229 = vpop.f32.mrf.mxu0
    %v230 = vadd.f32 %v177, %v229
    %231 = vdwg.mxu0
    %232 = vmatpush.msra.mxu0 0.0
    %233 = vmatpush.msra.mxu0 0.0
    %234 = vmatpush.msra.mxu0 0.0
    %235 = vmatpush.msra.mxu0 0.0
    %236 = vmatpush.msra.mxu0 0.0
    %237 = vmatpush.msra.mxu0 0.0
    %238 = vmatpush.msra.mxu0 0.0
    %239 = vmatpush.msra.mxu0 0.0
    %240 = vmatpush.msra.mxu0 0.0
    %241 = vmatpush.msra.mxu0 0.0
    %242 = vmatpush.msra.mxu0 0.0
    %243 = vmatpush.msra.mxu0 0.0
    %244 = vmatpush.msra.mxu0 %v163
    %245 = vmatpush.msra.mxu0 %v155
    %246 = vmatpush.msra.mxu0 %v147
    %247 = vmatpush.msra.mxu0 %v139
    %248 = vmatmul.f32.gmra.mxu0 %v181
    %v249 = vpop.f32.mrf.mxu0
    %v250 = vadd.f32 %v173, %v249
    %251 = vmatmul.f32.gmra.mxu0 %v184
    %v252 = vpop.f32.mrf.mxu0
    %v253 = vadd.f32 %v177, %v252
    %254 = vdwg.mxu0
    %255 = vmatpush.msra.mxu0 0.0
    %256 = vmatpush.msra.mxu0 0.0
    %257 = vmatpush.msra.mxu0 0.0
    %258 = vmatpush.msra.mxu0 0.0
    %259 = vmatpush.msra.mxu0 0.0
    %260 = vmatpush.msra.mxu0 0.0
    %261 = vmatpush.msra.mxu0 0.0
    %262 = vmatpush.msra.mxu0 0.0
    %263 = vmatpush.msra.mxu0 0.0
    %264 = vmatpush.msra.mxu0 0.0
    %265 = vmatpush.msra.mxu0 0.0
    %266 = vmatpush.msra.mxu0 0.0
    %267 = vmatpush.msra.mxu0 %v164
    %268 = vmatpush.msra.mxu0 %v156
    %269 = vmatpush.msra.mxu0 %v148
    %270 = vmatpush.msra.mxu0 %v140
    %271 = vmatmul.f32.gmra.mxu0 %v181
    %v272 = vpop.f32.mrf.mxu0
    %v273 = vadd.f32 %v173, %v272
    %274 = vmatmul.f32.gmra.mxu0 %v184
    %v275 = vpop.f32.mrf.mxu0
    %v276 = vadd.f32 %v177, %v275
    %277 = vdwg.mxu0
    %278 = vmatpush.msra.mxu0 0.0
    %279 = vmatpush.msra.mxu0 0.0
    %280 = vmatpush.msra.mxu0 0.0
    %281 = vmatpush.msra.mxu0 0.0
    %282 = vmatpush.msra.mxu0 0.0
    %283 = vmatpush.msra.mxu0 0.0
    %284 = vmatpush.msra.mxu0 0.0
    %285 = vmatpush.msra.mxu0 0.0
    %286 = vmatpush.msra.mxu0 0.0
    %287 = vmatpush.msra.mxu0 0.0
    %288 = vmatpush.msra.mxu0 0.0
    %289 = vmatpush.msra.mxu0 0.0
    %290 = vmatpush.msra.mxu0 %v165
    %291 = vmatpush.msra.mxu0 %v157
    %292 = vmatpush.msra.mxu0 %v149
    %293 = vmatpush.msra.mxu0 %v141
    %294 = vmatmul.f32.gmra.mxu0 %v181
    %v295 = vpop.f32.mrf.mxu0
    %v296 = vadd.f32 %v173, %v295
    %297 = vmatmul.f32.gmra.mxu0 %v184
    %v298 = vpop.f32.mrf.mxu0
    %v299 = vadd.f32 %v177, %v298
    %300 = vdwg.mxu0
    %301 = vmatpush.msra.mxu0 0.0
    %302 = vmatpush.msra.mxu0 0.0
    %303 = vmatpush.msra.mxu0 0.0
    %304 = vmatpush.msra.mxu0 0.0
    %305 = vmatpush.msra.mxu0 0.0
    %306 = vmatpush.msra.mxu0 0.0
    %307 = vmatpush.msra.mxu0 0.0
    %308 = vmatpush.msra.mxu0 0.0
    %309 = vmatpush.msra.mxu0 0.0
    %310 = vmatpush.msra.mxu0 0.0
    %311 = vmatpush.msra.mxu0 0.0
    %312 = vmatpush.msra.mxu0 0.0
    %313 = vmatpush.msra.mxu0 %v166
    %314 = vmatpush.msra.mxu0 %v158
    %315 = vmatpush.msra.mxu0 %v150
    %316 = vmatpush.msra.mxu0 %v142
    %317 = vmatmul.f32.gmra.mxu0 %v181
    %v318 = vpop.f32.mrf.mxu0
    %v319 = vadd.f32 %v173, %v318
    %320 = vmatmul.f32.gmra.mxu0 %v184
    %v321 = vpop.f32.mrf.mxu0
    %v322 = vadd.f32 %v177, %v321
    %323 = vdwg.mxu0
    %324 = vmatpush.msra.mxu0 0.0
    %325 = vmatpush.msra.mxu0 0.0
    %326 = vmatpush.msra.mxu0 0.0
    %327 = vmatpush.msra.mxu0 0.0
    %328 = vmatpush.msra.mxu0 0.0
    %329 = vmatpush.msra.mxu0 0.0
    %330 = vmatpush.msra.mxu0 0.0
    %331 = vmatpush.msra.mxu0 0.0
    %332 = vmatpush.msra.mxu0 0.0
    %333 = vmatpush.msra.mxu0 0.0
    %334 = vmatpush.msra.mxu0 0.0
    %335 = vmatpush.msra.mxu0 0.0
    %336 = vmatpush.msra.mxu0 %v167
    %337 = vmatpush.msra.mxu0 %v159
    %338 = vmatpush.msra.mxu0 %v151
    %339 = vmatpush.msra.mxu0 %v143
    %340 = vmatmul.f32.gmra.mxu0 %v181
    %v341 = vpop.f32.mrf.mxu0
    %v342 = vadd.f32 %v173, %v341
    %343 = vmatmul.f32.gmra.mxu0 %v184
    %v344 = vpop.f32.mrf.mxu0
    %v345 = vadd.f32 %v177, %v344
    %346 = vdwg.mxu0
    %347 = vmatpush.msra.mxu0 0.0
    %348 = vmatpush.msra.mxu0 0.0
    %349 = vmatpush.msra.mxu0 0.0
    %350 = vmatpush.msra.mxu0 0.0
    %351 = vmatpush.msra.mxu0 0.0
    %352 = vmatpush.msra.mxu0 0.0
    %353 = vmatpush.msra.mxu0 0.0
    %354 = vmatpush.msra.mxu0 0.0
    %355 = vmatpush.msra.mxu0 0.0
    %356 = vmatpush.msra.mxu0 0.0
    %357 = vmatpush.msra.mxu0 0.0
    %358 = vmatpush.msra.mxu0 0.0
    %359 = vmatpush.msra.mxu0 %v168
    %360 = vmatpush.msra.mxu0 %v160
    %361 = vmatpush.msra.mxu0 %v152
    %362 = vmatpush.msra.mxu0 %v144
    %363 = vmatmul.f32.gmra.mxu0 %v181
    %v364 = vpop.f32.mrf.mxu0
    %v365 = vadd.f32 %v173, %v364
    %366 = vmatmul.f32.gmra.mxu0 %v184
    %v367 = vpop.f32.mrf.mxu0
    %v368 = vadd.f32 %v177, %v367
    %369 = vdwg.mxu0
    %v370 = vtanh.pop %v204
    %v371 = vtanh.pop %v227
    %v372 = vtanh.pop %v250
    %v373 = vtanh.pop %v273
    %v374 = vtanh.pop %v296
    %v375 = vtanh.pop %v319
    %v376 = vtanh.pop %v342
    %v377 = vtanh.pop %v365
    %v378 = vtanh.pop %v207
    %v379 = vtanh.pop %v230
    %v380 = vtanh.pop %v253
    %v381 = vtanh.pop %v276
    %v382 = vtanh.pop %v299
    %v383 = vtanh.pop %v322
    %v384 = vtanh.pop %v345
    %v385 = vtanh.pop %v368
    %386 = vset.pattern.permute.xlu0 3
    %387 = vperm.xlu0 %386, %v16
    %v388 = vpop.permute.xlu0 %387
    %390 = vset.pattern.permute.xlu0 3
    %391 = vperm.xlu0 %390, %v17
    %v392 = vpop.permute.xlu0 %391
    %v394 = vmul.f32 %v370, %v388
    %v395 = vmul.f32 %v371, %v388
    %v396 = vmul.f32 %v372, %v388
    %v397 = vmul.f32 %v373, %v388
    %v398 = vmul.f32 %v374, %v388
    %v399 = vmul.f32 %v375, %v388
    %v400 = vmul.f32 %v376, %v388
    %v401 = vmul.f32 %v377, %v388
    %v402 = vmul.f32 %v378, %v392
    %v403 = vmul.f32 %v379, %v392
    %v404 = vmul.f32 %v380, %v392
    %v405 = vmul.f32 %v381, %v392
    %v406 = vmul.f32 %v382, %v392
    %v407 = vmul.f32 %v383, %v392
    %v408 = vmul.f32 %v384, %v392
    %v409 = vmul.f32 %v385, %v392
    %v410 = vadd.f32 %v394, %v402
    %v411 = vrot.slane %v410, 4
    %v412 = vadd.f32 %v410, %v411
    %v413 = vrot.slane %v412, 2
    %v414 = vadd.f32 %v412, %v413
    %v415 = vrot.slane %v414, 1
    %v416 = vadd.f32 %v414, %v415
    %v417 = vadd.f32 %v395, %v403
    %v418 = vrot.slane %v417, 4
    %v419 = vadd.f32 %v417, %v418
    %v420 = vrot.slane %v419, 2
    %v421 = vadd.f32 %v419, %v420
    %v422 = vrot.slane %v421, 1
    %v423 = vadd.f32 %v421, %v422
    %v424 = vadd.f32 %v396, %v404
    %v425 = vrot.slane %v424, 4
    %v426 = vadd.f32 %v424, %v425
    %v427 = vrot.slane %v426, 2
    %v428 = vadd.f32 %v426, %v427
    %v429 = vrot.slane %v428, 1
    %v430 = vadd.f32 %v428, %v429
    %v431 = vadd.f32 %v397, %v405
    %v432 = vrot.slane %v431, 4
    %v433 = vadd.f32 %v431, %v432
    %v434 = vrot.slane %v433, 2
    %v435 = vadd.f32 %v433, %v434
    %v436 = vrot.slane %v435, 1
    %v437 = vadd.f32 %v435, %v436
    %v438 = vadd.f32 %v398, %v406
    %v439 = vrot.slane %v438, 4
    %v440 = vadd.f32 %v438, %v439
    %v441 = vrot.slane %v440, 2
    %v442 = vadd.f32 %v440, %v441
    %v443 = vrot.slane %v442, 1
    %v444 = vadd.f32 %v442, %v443
    %v445 = vadd.f32 %v399, %v407
    %v446 = vrot.slane %v445, 4
    %v447 = vadd.f32 %v445, %v446
    %v448 = vrot.slane %v447, 2
    %v449 = vadd.f32 %v447, %v448
    %v450 = vrot.slane %v449, 1
    %v451 = vadd.f32 %v449, %v450
    %v452 = vadd.f32 %v400, %v408
    %v453 = vrot.slane %v452, 4
    %v454 = vadd.f32 %v452, %v453
    %v455 = vrot.slane %v454, 2
    %v456 = vadd.f32 %v454, %v455
    %v457 = vrot.slane %v456, 1
    %v458 = vadd.f32 %v456, %v457
    %v459 = vadd.f32 %v401, %v409
    %v460 = vrot.slane %v459, 4
    %v461 = vadd.f32 %v459, %v460
    %v462 = vrot.slane %v461, 2
    %v463 = vadd.f32 %v461, %v462
    %v464 = vrot.slane %v463, 1
    %v465 = vadd.f32 %v463, %v464
    %466 = vset.pattern.permute.xlu0 4
    %467 = vperm.xlu0 %466, %v16
    %v468 = vpop.permute.xlu0 %467
    %v470 = vadd.f32 %v416, %v468
    %v471 = vadd.f32 %v423, %v468
    %v472 = vadd.f32 %v430, %v468
    %v473 = vadd.f32 %v437, %v468
    %v474 = vadd.f32 %v444, %v468
    %v475 = vadd.f32 %v451, %v468
    %v476 = vadd.f32 %v458, %v468
    %v477 = vadd.f32 %v465, %v468
    %v486 = vrot.slane %v471, 7
    %v487 = vrot.slane %v472, 6
    %v488 = vrot.slane %v473, 5
    %v489 = vrot.slane %v474, 4
    %v490 = vrot.slane %v475, 3
    %v491 = vrot.slane %v476, 2
    %v492 = vrot.slane %v477, 1
    %vm493 = vcmask 1040384
    %v494 = vsel %vm493, %v470, %v486
    %vm495 = vcmask 1042434
    %v496 = vsel %vm495, %v487, %v488
    %vm497 = vcmask 1041408
    %v498 = vsel %vm497, %v494, %v496
    %vm499 = vcmask 1044484
    %v500 = vsel %vm499, %v489, %v490
    %vm501 = vcmask 1046534
    %v502 = vsel %vm501, %v491, %v492
    %vm503 = vcmask 1045508
    %v504 = vsel %vm503, %v500, %v502
    %vm505 = vcmask 1043456
    %v506 = vsel %vm505, %v498, %v504
    %508 = vst [vmem:[#allocation2] sm:$0xff] %v506
    // Predicated region
    $region14: #{net_forward.1} parent=1 // pred_check
      _
    $region15: #{net_forward.1} parent=1 // pred_check_branch
      %510 = sbr.rel (0) target = $region17
    $region16: #{net_forward.1} parent=1 // pred_region
      %512 = vsyncadd [#allocation3], 0
      %s514 = sshll.u32 [#allocation2], 4
      %s515 = int_to_ptr.vmem [resolvable:$true] %s514
      %s516 = sshll.u32 %s3, 4
      %s517 = int_to_ptr.hbm [resolvable:$true] %s516
      %519 = dma.vmem_to_hbm [thread:$0]  %s515, 128, %s517, [#allocation3]
    $region17: #{net_forward.1} parent=1 // pred_fallthru
      _
    // Predicated region
    $region18: #{net_forward.1} parent=1 // pred_check
      _
    $region19: #{net_forward.1} parent=1 // pred_check_branch
      %521 = sbr.rel (0) target = $region21
    $region20: #{net_forward.1} parent=1 // pred_region
      %523 = dma.done [#allocation3], 128
    $region21: #{net_forward.1} parent=1 // pred_fallthru
      _
    %524 = vsyncpa [#allocation3], 1

</llo_original>
